<compile_context>
chip_gen: v7x
topology: tpu7x:2x2x1
jax: 0.10.0
libtpu: 0.0.40
codegen_flags: <defaults>
</compile_context>

<pallas_src>
import jax
import jax.numpy as jnp
from jax.experimental import pallas as pl
from jax.experimental.pallas import tpu as pltpu


# ----------------------------------------------------------------------------
# Helpers mirroring the PyTorch module
# ----------------------------------------------------------------------------
def assert_all_equal(lst, error_prefix=''):
    if any(x != lst[0] for x in lst[1:]):
        if error_prefix and error_prefix[-1] != ' ':
            error_prefix = error_prefix + ' '
        elif not error_prefix:
            error_prefix = 'All values not equal: '
        raise ValueError('%s%s' % (error_prefix, lst))
    return True


def inputs_to_channels(inputs):
    """Identical to BodyMuxer._inputs_to_channels."""
    body_channels = []
    for input_indices in inputs:
        selected_channels = []
        for i in input_indices:
            selected_channels += (3 * i, 3 * i + 1, 3 * i + 2)
        body_channels.append(selected_channels)
    return body_channels


def _round_up(x, m):
    return (x + m - 1) // m * m


def _pick_row_tile(rows, target=512):
    """Row tile: multiple of 8, <= target, and (when possible) >= 2 grid steps
    so v7x's second TensorCore gets work."""
    if rows <= 8:
        return 8
    return max(8, min(target, _round_up((rows + 1) // 2, 8)))


# ----------------------------------------------------------------------------
# Pallas kernel: fused (all-bodies) im2col GEMM + bias + ReLU
# ----------------------------------------------------------------------------
def _fused_gemm_bias_relu_kernel(x_ref, w_ref, b_ref, o_ref):
    # x_ref: (TR, K)          im2col rows (K = 9 * C_total), row tile
    # w_ref: (K, Cout_pad)    block-structured fused weights (VMEM-resident)
    # b_ref: (1, Cout_pad)    fused bias (f32, VMEM-resident)
    # o_ref: (TR, Cout_pad)   merged conv output rows (lane-dense)
    acc = jnp.dot(x_ref[...], w_ref[...], preferred_element_type=jnp.float32)
    acc = acc + b_ref[...]
    o_ref[...] = jnp.maximum(acc, 0.0).astype(o_ref.dtype)


# ----------------------------------------------------------------------------
# BodyMuxer forward (concat-merge variant), fused across bodies
# ----------------------------------------------------------------------------
def body_muxer_forward(x_nchw, params, body_channels, *,
                       compute_dtype=jnp.float32, row_tile=512):
    """x_nchw: (N, 3*NUM_INPUTS, H, W).

    params: list of (w_hwio (3,3,Cin_b,Cout_b), bias (Cout_b,)) per body.
    Returns [out_0, ..., out_{B-1}, merged], each NCHW float32, matching
    `outputs + [concatenated_outputs]` in the PyTorch module.
    """
    N, C_total, H, W = x_nchw.shape
    HW = H * W
    K = 9 * C_total
    couts = [int(w.shape[-1]) for (w, _) in params]
    cout_sum = sum(couts)
    cout_pad = _round_up(cout_sum, 128)   # lane-dense output (multiple of 128)

    # ---- fused block-structured weights/bias: channel selection + body
    # stacking folded into one (K, cout_pad) matrix so a single GEMM emits the
    # merged output directly.  Padded Cout columns stay zero (ReLU(0+0)=0) and
    # are sliced off below.
    w_full = jnp.zeros((3, 3, C_total, cout_pad), jnp.float32)
    b_full = jnp.zeros((cout_pad,), jnp.float32)
    off = 0
    for (w, b), chans in zip(params, body_channels):
        cb = int(w.shape[-1])
        for ci, c in enumerate(chans):
            w_full = w_full.at[:, :, c, off:off + cb].set(w[:, :, ci, :])
        b_full = b_full.at[off:off + cb].set(b)
        off += cb
    wmat = w_full.reshape(K, cout_pad).astype(compute_dtype)
    b2 = b_full.reshape(1, cout_pad)      # bias kept in f32

    # ---- glue: zero-pad + im2col over ALL channels (built once, shared by
    # every body).  Row ordering (kh, kw, c) matches w_full.reshape(K, ...).
    x_nhwc = jnp.transpose(x_nchw, (0, 2, 3, 1))
    xp = jnp.pad(x_nhwc, ((0, 0), (1, 1), (1, 1), (0, 0)))
    patches = [xp[:, kh:kh + H, kw:kw + W, :].reshape(N, HW, C_total)
               for kh in range(3) for kw in range(3)]
    cols = jnp.concatenate(patches, axis=-1).reshape(N * HW, K)

    rows = N * HW
    tr = _pick_row_tile(rows, row_tile)
    rows_pad = _round_up(rows, tr)
    if rows_pad != rows:
        cols = jnp.pad(cols, ((0, rows_pad - rows), (0, 0)))
    cols = cols.astype(compute_dtype)

    # Explicit VMEM budget with ~4x headroom (double-buffered cols/out tiles +
    # resident weights/bias); clamped to stay safe on v5e/v7x scoped limits.
    elt = jnp.dtype(compute_dtype).itemsize
    vmem_need = (2 * tr * K * elt + 2 * tr * cout_pad * 4
                 + K * cout_pad * elt + 8 * cout_pad)
    vmem_limit = int(min(max(4 * vmem_need, 16 * 2 ** 20), 64 * 2 ** 20))

    out = pl.pallas_call(
        _fused_gemm_bias_relu_kernel,
        out_shape=jax.ShapeDtypeStruct((rows_pad, cout_pad), jnp.float32),
        grid_spec=pltpu.PrefetchScalarGridSpec(
            num_scalar_prefetch=0,
            grid=(rows_pad // tr,),
            in_specs=[
                pl.BlockSpec((tr, K), lambda r: (r, 0)),
                pl.BlockSpec((K, cout_pad), lambda r: (0, 0)),   # resident
                pl.BlockSpec((1, cout_pad), lambda r: (0, 0)),   # resident
            ],
            out_specs=pl.BlockSpec((tr, cout_pad), lambda r: (r, 0)),
        ),
        compiler_params=pltpu.CompilerParams(
            dimension_semantics=("parallel",),
            vmem_limit_bytes=vmem_limit),
    )(cols, wmat, b2)

    # ---- unpack: merged output (= _merge via channel concat) comes straight
    # out of the fused GEMM; per-body outputs are channel slices of it.
    merged_nhwc = out[:rows, :cout_sum].reshape(N, H, W, cout_sum)
    merged = jnp.transpose(merged_nhwc, (0, 3, 1, 2))            # NCHW

    outputs = []
    off = 0
    for cb in couts:
        outputs.append(merged[:, off:off + cb])
        off += cb
    return outputs + [merged]


# ----------------------------------------------------------------------------
# Pure-JAX reference (numerical sanity check)
# ----------------------------------------------------------------------------
def _reference_forward(x_nchw, params, body_channels):
    outputs = []
    for (w_hwio, b), chans in zip(params, body_channels):
        x_sel = jnp.take(x_nchw, jnp.asarray(chans), axis=1)
        x_nhwc = jnp.transpose(x_sel, (0, 2, 3, 1))
        y = jax.lax.conv_general_dilated(
            x_nhwc, w_hwio, window_strides=(1, 1), padding='SAME',
            dimension_numbers=('NHWC', 'HWIO', 'NHWC'),
            precision=jax.lax.Precision.HIGHEST)
        y = jnp.maximum(y + b[None, None, None, :], 0.0)
        outputs.append(jnp.transpose(y, (0, 3, 1, 2)))
    return outputs + [jnp.concatenate(outputs, axis=1)]


# ----------------------------------------------------------------------------
if __name__ == "__main__":
    # Small, forward-consistent shapes: 2 inputs -> 6 channels total.
    N, NUM_INPUTS, H, W = 2, 2, 16, 16
    COUT = 32
    conv_body_inputs = [[0], [1]]          # body 0 <- input 0, body 1 <- input 1
    body_channels = inputs_to_channels(conv_body_inputs)
    B = len(body_channels)

    # All bodies share the same spatial scale (here: 1.0) -- mirror the check.
    assert_all_equal([1.0 for _ in conv_body_inputs],
                     'Spatial scales of bodies do not match:')

    key = jax.random.PRNGKey(0)
    keys = jax.random.split(key, 1 + 2 * B)
    k_x, k_params = keys[0], keys[1:]

    x = jax.random.normal(k_x, (N, 3 * NUM_INPUTS, H, W), dtype=jnp.float32)

    params = []
    for i, chans in enumerate(body_channels):
        cin = len(chans)
        w = 0.1 * jax.random.normal(k_params[2 * i], (3, 3, cin, COUT),
                                    dtype=jnp.float32)
        b = 0.01 * jax.random.normal(k_params[2 * i + 1], (COUT,),
                                     dtype=jnp.float32)
        params.append((w, b))

    refs = _reference_forward(x, params, body_channels)

    # ---- f32 path (default): tight tolerance ----
    fwd_f32 = jax.jit(lambda xx, pp: body_muxer_forward(xx, pp, body_channels))
    outs = jax.block_until_ready(fwd_f32(x, params))

    assert outs[0].shape == (N, COUT, H, W), outs[0].shape
    assert outs[1].shape == (N, COUT, H, W), outs[1].shape
    assert outs[2].shape == (N, COUT * B, H, W), outs[2].shape
    assert all(o.dtype == jnp.float32 for o in outs)
    for o, r in zip(outs, refs):
        err = float(jnp.max(jnp.abs(o - r)))
        assert jnp.allclose(o, r, atol=1e-4, rtol=1e-4), err

    # ---- bf16 MXU-input path (v6e/v7x): f32 accumulation, looser tolerance ----
    fwd_bf16 = jax.jit(lambda xx, pp: body_muxer_forward(
        xx, pp, body_channels, compute_dtype=jnp.bfloat16))
    outs_bf = jax.block_until_ready(fwd_bf16(x, params))
    for o, r in zip(outs_bf, refs):
        err = float(jnp.max(jnp.abs(o - r)))
        assert jnp.allclose(o, r, atol=5e-2, rtol=5e-2), err

    print("KERNEL_OK")
</pallas_src>

<mosaic_0001>
module attributes {stable_mosaic.version = 11 : i64} {
  func.func @_fused_gemm_bias_relu_kernel(%arg0: i32, %arg1: memref<256x54xf32, #tpu.memory_space<vmem>>, %arg2: memref<54x128xf32, #tpu.memory_space<vmem>>, %arg3: memref<1x128xf32, #tpu.memory_space<vmem>>, %arg4: memref<256x128xf32, #tpu.memory_space<vmem>>) attributes {dimension_semantics = [#tpu.dimension_semantics<parallel>], iteration_bounds = array<i64: 2>, scalar_prefetch = 0 : i64, scratch_operands = 0 : i64, tpu.core_type = #tpu.core_type<tc>, window_params = [{transform_indices = @transform_0, window_bounds = array<i64: 256, 54>}, {pipeline_mode = #tpu.pipeline_mode<synchronous>, transform_indices = @transform_1, window_bounds = array<i64: 54, 128>}, {pipeline_mode = #tpu.pipeline_mode<synchronous>, transform_indices = @transform_2, window_bounds = array<i64: 1, 128>}, {transform_indices = @transform_3, window_bounds = array<i64: 256, 128>}]} {
    %c0 = arith.constant 0 : index
    %c0_0 = arith.constant 0 : index
    %0 = vector.load %arg1[%c0, %c0_0] : memref<256x54xf32, #tpu.memory_space<vmem>>, vector<256x54xf32>
    %c0_1 = arith.constant 0 : index
    %c0_2 = arith.constant 0 : index
    %1 = vector.load %arg2[%c0_1, %c0_2] : memref<54x128xf32, #tpu.memory_space<vmem>>, vector<54x128xf32>
    %cst = arith.constant dense<0.000000e+00> : vector<256x128xf32>
    %2 = tpu.matmul %0, %1, %cst {dimension_numbers = #tpu.dot_dimension_numbers<[1], [0], [0], [1], [0, 0, 1, 1], [], []>} : vector<256x54xf32>, vector<54x128xf32>, vector<256x128xf32> -> vector<256x128xf32>
    %c0_3 = arith.constant 0 : index
    %c0_4 = arith.constant 0 : index
    %3 = vector.load %arg3[%c0_3, %c0_4] : memref<1x128xf32, #tpu.memory_space<vmem>>, vector<1x128xf32>
    %4 = vector.broadcast %3 : vector<1x128xf32> to vector<256x128xf32>
    %5 = arith.addf %2, %4 : vector<256x128xf32>
    %cst_5 = arith.constant 0.000000e+00 : f32
    %6 = vector.broadcast %cst_5 : f32 to vector<256x128xf32>
    %7 = arith.maximumf %5, %6 : vector<256x128xf32>
    %c0_6 = arith.constant 0 : index
    %c0_7 = arith.constant 0 : index
    %8 = vector.load %arg4[%c0_6, %c0_7] : memref<256x128xf32, #tpu.memory_space<vmem>>, vector<256x128xf32>
    tpu.vector_store %arg4[%c0_6, %c0_7], %7 {strides = array<i32>} : memref<256x128xf32, #tpu.memory_space<vmem>>, vector<256x128xf32>,
    return
  }
  func.func @transform_0(%arg0: i32) -> (i32, i32) {
    %c0_i32 = arith.constant 0 : i32
    %c0_i32_0 = arith.constant 0 : i32
    return %arg0, %c0_i32 : i32, i32
  }
  func.func @transform_1(%arg0: i32) -> (i32, i32) {
    %c0_i32 = arith.constant 0 : i32
    %c0_i32_0 = arith.constant 0 : i32
    %c0_i32_1 = arith.constant 0 : i32
    return %c0_i32, %c0_i32_0 : i32, i32
  }
  func.func @transform_2(%arg0: i32) -> (i32, i32) {
    %c0_i32 = arith.constant 0 : i32
    %c0_i32_0 = arith.constant 0 : i32
    %c0_i32_1 = arith.constant 0 : i32
    return %c0_i32, %c0_i32_0 : i32, i32
  }
  func.func @transform_3(%arg0: i32) -> (i32, i32) {
    %c0_i32 = arith.constant 0 : i32
    %c0_i32_0 = arith.constant 0 : i32
    return %arg0, %c0_i32 : i32, i32
  }
}

</mosaic_0001>

<llo_original>
// kernel: _lambda_.1
$region0: #{_lambda_.1}
  #allocation0 [shape = 'u32[]', space=smem, size = 0x4, offset = 0x4, fixed_abs, tag = 'smem constant byte address 0x4 - core index']
  #allocation1 [shape = 'u32[144,128]{1,0:T(1,128)}', space=vmem, size = 0x12000, scoped, tag = 'internal scratch']
  %s0 = inlined_call_operand.vmem [shape: f32[512,54], index: 0, kind: input, shape index: {}]
  %s1 = inlined_call_operand.vmem [shape: f32[54,128], index: 1, kind: input, shape index: {}]
  %s2 = inlined_call_operand.vmem [shape: f32[1,128], index: 2, kind: input, shape index: {}]
  %s3 = inlined_call_operand.vmem [shape: f32[512,128], index: 3, kind: output, shape index: {}]
  %s4 = sld [smem:[#allocation0]]
  $region45: #{_lambda_.1} parent=0
    _
  %s6 = ssub.s32 1, %s4
  %s7 = scalar_select 0, %s6, %s4
  loop: start=0, step=1, limit=4
  $region2: #{_lambda_.1} parent=0 // loop_pre_header
    _
  $region3: #{_lambda_.1} parent=0 // loop_header
    %s9 = sphi 0, %s13
    %p10 = scmp.ge.s32.totalorder %s9, 4
    %s19 = sphi 0, %s21
    %s22 = sphi 0, %s19
    %s23 = sphi 0, %s22
    %s39 = sphi 0, %s23
    %s43 = sphi 0, %s43
    %s45 = sphi 0, %s43
    %s46 = sphi 0, %s45
    %s60 = sphi 0, %s46
    %s64 = sphi 0, %s64
    %s66 = sphi 0, %s64
    %s67 = sphi 0, %s66
    %s81 = sphi 0, %s67
    %s87 = sphi 0, %s89
    %s90 = sphi 0, %s87
    %s91 = sphi 0, %s90
    %s107 = sphi 0, %s91
  $region4: #{_lambda_.1} parent=0 // loop_header_branch
    %12 = sbr.rel (%p10) target = $region8
  $region5: #{_lambda_.1} parent=0 // loop_body
    %s14 = ssub.s32 %s9, 1
    %s15 = ssub.s32 %s9, 2
    %s16 = sadd.s32 %s9, 1
    %s17 = ssub.s32 %s9, %s16
    %p18 = scmp.eq.s32.totalorder %s17, 0
    %s20 = sadd.s32 %s19, 1
    %s21 = scalar_select %p18, %s19, %s20
    %p24 = pneg %p18
    %p25 = scmp.eq.s32.totalorder %s9, 1
    %p26 = por %p24, %p25
    %p27 = scmp.ne.s32.totalorder %s19, %s22
    %p28 = scmp.eq.s32.totalorder %s9, 0
    %p29 = por %p27, %p28
    %p30 = scmp.ne.s32.totalorder %s19, %s22
    %p31 = scmp.eq.s32.totalorder %s14, 1
    %p32 = por %p30, %p31
    %p33 = scmp.ne.s32.totalorder %s22, %s23
    %p34 = scmp.eq.s32.totalorder %s14, 0
    %p35 = por %p33, %p34
    %p36 = scmp.ne.s32.totalorder %s22, %s23
    %p37 = scmp.eq.s32.totalorder %s15, 1
    %p38 = por %p36, %p37
    %p40 = scmp.ne.s32.totalorder %s23, %s39
    %p41 = scmp.eq.s32.totalorder %s15, 0
    %p42 = por %p40, %p41
    %s44 = sadd.s32 %s43, 1
    %p47 = scmp.eq.s32.totalorder %s9, 1
    %p48 = scmp.ne.s32.totalorder %s43, %s45
    %p49 = scmp.eq.s32.totalorder %s9, 0
    %p50 = por %p48, %p49
    %p51 = scmp.ne.s32.totalorder %s43, %s45
    %p52 = scmp.eq.s32.totalorder %s14, 1
    %p53 = por %p51, %p52
    %p54 = scmp.ne.s32.totalorder %s45, %s46
    %p55 = scmp.eq.s32.totalorder %s14, 0
    %p56 = por %p54, %p55
    %p57 = scmp.ne.s32.totalorder %s45, %s46
    %p58 = scmp.eq.s32.totalorder %s15, 1
    %p59 = por %p57, %p58
    %p61 = scmp.ne.s32.totalorder %s46, %s60
    %p62 = scmp.eq.s32.totalorder %s15, 0
    %p63 = por %p61, %p62
    %s65 = sadd.s32 %s64, 1
    %p68 = scmp.eq.s32.totalorder %s9, 1
    %p69 = scmp.ne.s32.totalorder %s64, %s66
    %p70 = scmp.eq.s32.totalorder %s9, 0
    %p71 = por %p69, %p70
    %p72 = scmp.ne.s32.totalorder %s64, %s66
    %p73 = scmp.eq.s32.totalorder %s14, 1
    %p74 = por %p72, %p73
    %p75 = scmp.ne.s32.totalorder %s66, %s67
    %p76 = scmp.eq.s32.totalorder %s14, 0
    %p77 = por %p75, %p76
    %p78 = scmp.ne.s32.totalorder %s66, %s67
    %p79 = scmp.eq.s32.totalorder %s15, 1
    %p80 = por %p78, %p79
    %p82 = scmp.ne.s32.totalorder %s67, %s81
    %p83 = scmp.eq.s32.totalorder %s15, 0
    %p84 = por %p82, %p83
    %s85 = ssub.s32 %s9, %s16
    %p86 = scmp.eq.s32.totalorder %s85, 0
    %s88 = sadd.s32 %s87, 1
    %s89 = scalar_select %p86, %s87, %s88
    %p92 = pneg %p86
    %p93 = scmp.eq.s32.totalorder %s9, 1
    %p94 = por %p92, %p93
    %p95 = scmp.ne.s32.totalorder %s87, %s90
    %p96 = scmp.eq.s32.totalorder %s9, 0
    %p97 = por %p95, %p96
    %p98 = scmp.ne.s32.totalorder %s87, %s90
    %p99 = scmp.eq.s32.totalorder %s14, 1
    %p100 = por %p98, %p99
    %p101 = scmp.ne.s32.totalorder %s90, %s91
    %p102 = scmp.eq.s32.totalorder %s14, 0
    %p103 = por %p101, %p102
    %p104 = scmp.ne.s32.totalorder %s90, %s91
    %p105 = scmp.eq.s32.totalorder %s15, 1
    %p106 = por %p104, %p105
    %p108 = scmp.ne.s32.totalorder %s91, %s107
    %p109 = scmp.eq.s32.totalorder %s15, 0
    %p110 = por %p108, %p109
    %p111 = scmp.le.s32.totalorder 1, %s9
    %p112 = scmp.lt.s32.totalorder %s9, 3
    %p113 = pnand %p111, %p112
    %p114 = pneg %p113
    // Predicated region
    $region9: #{_lambda_.1} parent=5 // pred_check
      _
    $region10: #{_lambda_.1} parent=5 // pred_check_branch
      %116 = sbr.rel (%p113) target = $region12
    $region11: #{_lambda_.1} parent=5 // pred_region
      %s117 = ssub.s32 %s9, 1
      // Predicated region
      $region13: #{_lambda_.1} parent=11 // pred_check
        %p118 = pneg %p56
      $region14: #{_lambda_.1} parent=11 // pred_check_branch
        %120 = sbr.rel (%p118) target = $region16
      $region15: #{_lambda_.1} parent=11 // pred_region
        _
      $region16: #{_lambda_.1} parent=11 // pred_fallthru
        _
      // Predicated region
      $region17: #{_lambda_.1} parent=11 // pred_check
        %p121 = pneg %p77
      $region18: #{_lambda_.1} parent=11 // pred_check_branch
        %123 = sbr.rel (%p121) target = $region20
      $region19: #{_lambda_.1} parent=11 // pred_region
        _
      $region20: #{_lambda_.1} parent=11 // pred_fallthru
        _
    $region12: #{_lambda_.1} parent=5 // pred_fallthru
      _
    %p124 = scmp.lt.s32.totalorder %s9, 2
    // Predicated region
    $region21: #{_lambda_.1} parent=5 // pred_check
      %p125 = pneg %p124
    $region22: #{_lambda_.1} parent=5 // pred_check_branch
      %127 = sbr.rel (%p125) target = $region24
    $region23: #{_lambda_.1} parent=5 // pred_region
      // Predicated region
      $region25: #{_lambda_.1} parent=23 // pred_check
        %p128 = pneg %p29
      $region26: #{_lambda_.1} parent=23 // pred_check_branch
        %130 = sbr.rel (%p128) target = $region28
      $region27: #{_lambda_.1} parent=23 // pred_region
        %s131 = smul.u32 32, %s9
        %p132 = scmp.lt.s32.totalorder %s131, 63
        %s133 = scalar_select %p132, %s131, 63
        %s134 = smul.addr %s133, 8
        %s135 = scalar_lea.vmem %s0, %s134
        %s136 = smul.u32 32, %s9
      $region28: #{_lambda_.1} parent=23 // pred_fallthru
        _
    $region24: #{_lambda_.1} parent=5 // pred_fallthru
      _
    %p137 = scmp.le.s32.totalorder 1, %s9
    %p138 = scmp.lt.s32.totalorder %s9, 3
    %p139 = pnand %p137, %p138
    %p140 = pneg %p139
    // Predicated region
    $region29: #{_lambda_.1} parent=5 // pred_check
      _
    $region30: #{_lambda_.1} parent=5 // pred_check_branch
      %142 = sbr.rel (%p139) target = $region32
    $region31: #{_lambda_.1} parent=5 // pred_region
      %s143 = ssub.s32 %s9, 1
      %s144 = smul.u32 32, %s14
      %p145 = scmp.lt.s32.totalorder %s144, 63
      %s146 = scalar_select %p145, %s144, 63
      %s147 = smul.addr %s146, 8
      %s148 = scalar_lea.vmem %s0, %s147
      %p149 = pneg %p35
      %p150 = pneg %p32
      %p151 = pneg %p56
      %p152 = pneg %p53
      %p153 = pneg %p77
      %p154 = pneg %p74
      %p155 = pneg %p103
      %p156 = pneg %p100
      %s157 = smul.u32 32, %s14
      %p158 = scmp.lt.s32.totalorder %s157, 63
      %s159 = scalar_select %p158, %s157, 63
      %s160 = smul.addr %s159, 8
      %s161 = scalar_lea.vmem %s3, %s160
      %s162 = smul.u32 32, %s14
      %p163 = scmp.lt.s32.totalorder %s162, 63
      %s164 = scalar_select %p163, %s162, 63
      %s165 = smul.addr %s164, 8
      %s166 = scalar_lea.vmem %s0, %s165
      %s167 = smul.u32 32, %s14
      %s168 = smul.u32 32, %s14
      %p169 = scmp.lt.s32.totalorder %s168, 63
      %s170 = scalar_select %p169, %s168, 63
      %s171 = smul.addr %s170, 8
      %s172 = scalar_lea.vmem %s3, %s171
      %s173 = smul.u32 32, %s14
      %v174 = vld [vmem:[%s166] sm:$0xff]
      %v175 = vld [vmem:[%s166 + $0x8] sm:$0xff]
      %v176 = vld [vmem:[%s166 + $0x10] sm:$0xff]
      %v177 = vld [vmem:[%s166 + $0x18] sm:$0xff]
      %v178 = vld [vmem:[%s166 + $0x20] sm:$0xff]
      %v179 = vld [vmem:[%s166 + $0x28] sm:$0xff]
      %v180 = vld [vmem:[%s166 + $0x30] sm:$0xff]
      %v181 = vld [vmem:[%s166 + $0x38] sm:$0xff]
      %v182 = vld [vmem:[%s166 + $0x40] sm:$0xff]
      %v183 = vld [vmem:[%s166 + $0x48] sm:$0xff]
      %v184 = vld [vmem:[%s166 + $0x50] sm:$0xff]
      %v185 = vld [vmem:[%s166 + $0x58] sm:$0xff]
      %v186 = vld [vmem:[%s166 + $0x60] sm:$0xff]
      %v187 = vld [vmem:[%s166 + $0x68] sm:$0xff]
      %v188 = vld [vmem:[%s166 + $0x70] sm:$0xff]
      %v189 = vld [vmem:[%s166 + $0x78] sm:$0xff]
      %v190 = vld [vmem:[%s166 + $0x80] sm:$0xff]
      %v191 = vld [vmem:[%s166 + $0x88] sm:$0xff]
      %v192 = vld [vmem:[%s166 + $0x90] sm:$0xff]
      %v193 = vld [vmem:[%s166 + $0x98] sm:$0xff]
      %v194 = vld [vmem:[%s166 + $0xa0] sm:$0xff]
      %v195 = vld [vmem:[%s166 + $0xa8] sm:$0xff]
      %v196 = vld [vmem:[%s166 + $0xb0] sm:$0xff]
      %v197 = vld [vmem:[%s166 + $0xb8] sm:$0xff]
      %v198 = vld [vmem:[%s166 + $0xc0] sm:$0xff]
      %v199 = vld [vmem:[%s166 + $0xc8] sm:$0xff]
      %v200 = vld [vmem:[%s166 + $0xd0] sm:$0xff]
      %v201 = vld [vmem:[%s166 + $0xd8] sm:$0xff]
      %v202 = vld [vmem:[%s166 + $0xe0] sm:$0xff]
      %v203 = vld [vmem:[%s166 + $0xe8] sm:$0xff]
      %v204 = vld [vmem:[%s166 + $0xf0] sm:$0xff]
      %v205 = vld [vmem:[%s166 + $0xf8] sm:$0xff]
      %v206 = vld [vmem:[%s1] sm:$0xff]
      %v207 = vld [vmem:[%s1 + $0x8] sm:$0xff]
      %v208 = vld [vmem:[%s1 + $0x10] sm:$0xff]
      %v209 = vld [vmem:[%s1 + $0x18] sm:$0xff]
      %v210 = vld [vmem:[%s1 + $0x20] sm:$0xff]
      %v211 = vld [vmem:[%s1 + $0x28] sm:$0xff]
      %v212 = vld [vmem:[%s1 + $0x30] sm:$0x3f]
      %v213 = vld [vmem:[%s2] sm:$0x1]
      %v215 = vlaneseq
      %v216 = vshrl.u32 %v215, 7
      %v217 = vsub.s32 0, %v216
      %v218 = vrot.slane %v213, %v217
      %vm220 = vcmask 441344
      %v222 = vsel %vm220, %v174, 0
      %v225 = vsel %vm220, %v175, 0
      %v228 = vsel %vm220, %v176, 0
      %v231 = vsel %vm220, %v177, 0
      %v234 = vsel %vm220, %v178, 0
      %v237 = vsel %vm220, %v179, 0
      %v240 = vsel %vm220, %v180, 0
      %v243 = vsel %vm220, %v181, 0
      %v246 = vsel %vm220, %v182, 0
      %v249 = vsel %vm220, %v183, 0
      %v252 = vsel %vm220, %v184, 0
      %v255 = vsel %vm220, %v185, 0
      %v258 = vsel %vm220, %v186, 0
      %v261 = vsel %vm220, %v187, 0
      %v264 = vsel %vm220, %v188, 0
      %v267 = vsel %vm220, %v189, 0
      %v270 = vsel %vm220, %v190, 0
      %v273 = vsel %vm220, %v191, 0
      %v276 = vsel %vm220, %v192, 0
      %v279 = vsel %vm220, %v193, 0
      %v282 = vsel %vm220, %v194, 0
      %v285 = vsel %vm220, %v195, 0
      %v288 = vsel %vm220, %v196, 0
      %v291 = vsel %vm220, %v197, 0
      %v294 = vsel %vm220, %v198, 0
      %v297 = vsel %vm220, %v199, 0
      %v300 = vsel %vm220, %v200, 0
      %v303 = vsel %vm220, %v201, 0
      %v306 = vsel %vm220, %v202, 0
      %v309 = vsel %vm220, %v203, 0
      %v312 = vsel %vm220, %v204, 0
      %v315 = vsel %vm220, %v205, 0
      %vm317 = vcmask 1045504
      %v319 = vsel %vm317, %v212, 0
      %321 = vmatprep.subr.mxu0 0.0
      %322 = vmatpush1.msra.mxu0 %v206
      %323 = vmatprep.subr.mxu0 0.0
      %324 = vmatpush1.msra.mxu0 %v207
      %325 = vmatprep.subr.mxu0 0.0
      %326 = vmatpush1.msra.mxu0 %v208
      %327 = vmatprep.subr.mxu0 0.0
      %328 = vmatpush1.msra.mxu0 %v209
      %329 = vmatprep.subr.mxu0 0.0
      %330 = vmatpush1.msra.mxu0 %v210
      %331 = vmatprep.subr.mxu0 0.0
      %332 = vmatpush1.msra.mxu0 %v211
      %333 = vmatprep.subr.mxu0 0.0
      %334 = vmatpush1.msra.mxu0 %v319
      %335 = vmatprep.subr.mxu0 0.0
      %336 = vmatpush1.msra.mxu0 0.0
      %337 = vmatprep.subr.mxu0 0.0
      %338 = vmatpush1.msra.mxu0 0.0
      %339 = vmatprep.subr.mxu0 0.0
      %340 = vmatpush1.msra.mxu0 0.0
      %341 = vmatprep.subr.mxu0 0.0
      %342 = vmatpush1.msra.mxu0 0.0
      %343 = vmatprep.subr.mxu0 0.0
      %344 = vmatpush1.msra.mxu0 0.0
      %345 = vmatprep.subr.mxu0 0.0
      %346 = vmatpush1.msra.mxu0 0.0
      %347 = vmatprep.subr.mxu0 0.0
      %348 = vmatpush1.msra.mxu0 0.0
      %349 = vmatprep.subr.mxu0 0.0
      %350 = vmatpush1.msra.mxu0 0.0
      %351 = vmatprep.subr.mxu0 0.0
      %352 = vmatpush1.msra.mxu0 0.0
      %353 = vmatprep.subr.mxu0 0.0
      %354 = vmatpush1.msra.mxu0 0.0
      %355 = vmatprep.subr.mxu0 0.0
      %356 = vmatpush1.msra.mxu0 0.0
      %357 = vmatprep.subr.mxu0 0.0
      %358 = vmatpush1.msra.mxu0 0.0
      %359 = vmatprep.subr.mxu0 0.0
      %360 = vmatpush1.msra.mxu0 0.0
      %361 = vmatprep.subr.mxu0 0.0
      %362 = vmatpush1.msra.mxu0 0.0
      %363 = vmatprep.subr.mxu0 0.0
      %364 = vmatpush1.msra.mxu0 0.0
      %365 = vmatprep.subr.mxu0 0.0
      %366 = vmatpush1.msra.mxu0 0.0
      %367 = vmatprep.subr.mxu0 0.0
      %368 = vmatpush1.msra.mxu0 0.0
      %369 = vmatprep.subr.mxu0 0.0
      %370 = vmatpush1.msra.mxu0 0.0
      %371 = vmatprep.subr.mxu0 0.0
      %372 = vmatpush1.msra.mxu0 0.0
      %373 = vmatprep.subr.mxu0 0.0
      %374 = vmatpush1.msra.mxu0 0.0
      %375 = vmatprep.subr.mxu0 0.0
      %376 = vmatpush1.msra.mxu0 0.0
      %377 = vmatprep.subr.mxu0 0.0
      %378 = vmatpush1.msra.mxu0 0.0
      %379 = vmatprep.subr.mxu0 0.0
      %380 = vmatpush1.msra.mxu0 0.0
      %381 = vmatprep.subr.mxu0 0.0
      %382 = vmatpush1.msra.mxu0 0.0
      %383 = vmatprep.subr.mxu0 0.0
      %384 = vmatpush1.msra.mxu0 0.0
      %385 = vmatprep.mubr.f32.mxu0 0.0
      %386 = vmatmul.mubr.f32.gmra.mrb[0].mxu0 %v222
      %v387 = vpop.f32.mrb[0].mxu0
      %v388 = vadd.f32 %v218, %v387
      %v389 = vpop.f32.mrb[0].mxu0
      %390 = vmatprep.mubr.f32.mxu0 0.0
      %391 = vmatmul.mubr.f32.gmra.mrb[0].mxu0 %v225
      %v392 = vpop.f32.mrb[0].mxu0
      %v393 = vadd.f32 %v218, %v392
      %v394 = vpop.f32.mrb[0].mxu0
      %395 = vmatprep.mubr.f32.mxu0 0.0
      %396 = vmatmul.mubr.f32.gmra.mrb[0].mxu0 %v228
      %v397 = vpop.f32.mrb[0].mxu0
      %v398 = vadd.f32 %v218, %v397
      %v399 = vpop.f32.mrb[0].mxu0
      %400 = vmatprep.mubr.f32.mxu0 0.0
      %401 = vmatmul.mubr.f32.gmra.mrb[0].mxu0 %v231
      %v402 = vpop.f32.mrb[0].mxu0
      %v403 = vadd.f32 %v218, %v402
      %v404 = vpop.f32.mrb[0].mxu0
      %405 = vmatprep.mubr.f32.mxu0 0.0
      %406 = vmatmul.mubr.f32.gmra.mrb[0].mxu0 %v234
      %v407 = vpop.f32.mrb[0].mxu0
      %v408 = vadd.f32 %v218, %v407
      %v409 = vpop.f32.mrb[0].mxu0
      %410 = vmatprep.mubr.f32.mxu0 0.0
      %411 = vmatmul.mubr.f32.gmra.mrb[0].mxu0 %v237
      %v412 = vpop.f32.mrb[0].mxu0
      %v413 = vadd.f32 %v218, %v412
      %v414 = vpop.f32.mrb[0].mxu0
      %415 = vmatprep.mubr.f32.mxu0 0.0
      %416 = vmatmul.mubr.f32.gmra.mrb[0].mxu0 %v240
      %v417 = vpop.f32.mrb[0].mxu0
      %v418 = vadd.f32 %v218, %v417
      %v419 = vpop.f32.mrb[0].mxu0
      %420 = vmatprep.mubr.f32.mxu0 0.0
      %421 = vmatmul.mubr.f32.gmra.mrb[0].mxu0 %v243
      %v422 = vpop.f32.mrb[0].mxu0
      %v423 = vadd.f32 %v218, %v422
      %v424 = vpop.f32.mrb[0].mxu0
      %425 = vmatprep.mubr.f32.mxu0 0.0
      %426 = vmatmul.mubr.f32.gmra.mrb[0].mxu0 %v246
      %v427 = vpop.f32.mrb[0].mxu0
      %v428 = vadd.f32 %v218, %v427
      %v429 = vpop.f32.mrb[0].mxu0
      %430 = vmatprep.mubr.f32.mxu0 0.0
      %431 = vmatmul.mubr.f32.gmra.mrb[0].mxu0 %v249
      %v432 = vpop.f32.mrb[0].mxu0
      %v433 = vadd.f32 %v218, %v432
      %v434 = vpop.f32.mrb[0].mxu0
      %435 = vmatprep.mubr.f32.mxu0 0.0
      %436 = vmatmul.mubr.f32.gmra.mrb[0].mxu0 %v252
      %v437 = vpop.f32.mrb[0].mxu0
      %v438 = vadd.f32 %v218, %v437
      %v439 = vpop.f32.mrb[0].mxu0
      %440 = vmatprep.mubr.f32.mxu0 0.0
      %441 = vmatmul.mubr.f32.gmra.mrb[0].mxu0 %v255
      %v442 = vpop.f32.mrb[0].mxu0
      %v443 = vadd.f32 %v218, %v442
      %v444 = vpop.f32.mrb[0].mxu0
      %445 = vmatprep.mubr.f32.mxu0 0.0
      %446 = vmatmul.mubr.f32.gmra.mrb[0].mxu0 %v258
      %v447 = vpop.f32.mrb[0].mxu0
      %v448 = vadd.f32 %v218, %v447
      %v449 = vpop.f32.mrb[0].mxu0
      %450 = vmatprep.mubr.f32.mxu0 0.0
      %451 = vmatmul.mubr.f32.gmra.mrb[0].mxu0 %v261
      %v452 = vpop.f32.mrb[0].mxu0
      %v453 = vadd.f32 %v218, %v452
      %v454 = vpop.f32.mrb[0].mxu0
      %455 = vmatprep.mubr.f32.mxu0 0.0
      %456 = vmatmul.mubr.f32.gmra.mrb[0].mxu0 %v264
      %v457 = vpop.f32.mrb[0].mxu0
      %v458 = vadd.f32 %v218, %v457
      %v459 = vpop.f32.mrb[0].mxu0
      %460 = vmatprep.mubr.f32.mxu0 0.0
      %461 = vmatmul.mubr.f32.gmra.mrb[0].mxu0 %v267
      %v462 = vpop.f32.mrb[0].mxu0
      %v463 = vadd.f32 %v218, %v462
      %v464 = vpop.f32.mrb[0].mxu0
      %465 = vmatprep.mubr.f32.mxu0 0.0
      %466 = vmatmul.mubr.f32.gmra.mrb[0].mxu0 %v270
      %v467 = vpop.f32.mrb[0].mxu0
      %v468 = vadd.f32 %v218, %v467
      %v469 = vpop.f32.mrb[0].mxu0
      %470 = vmatprep.mubr.f32.mxu0 0.0
      %471 = vmatmul.mubr.f32.gmra.mrb[0].mxu0 %v273
      %v472 = vpop.f32.mrb[0].mxu0
      %v473 = vadd.f32 %v218, %v472
      %v474 = vpop.f32.mrb[0].mxu0
      %475 = vmatprep.mubr.f32.mxu0 0.0
      %476 = vmatmul.mubr.f32.gmra.mrb[0].mxu0 %v276
      %v477 = vpop.f32.mrb[0].mxu0
      %v478 = vadd.f32 %v218, %v477
      %v479 = vpop.f32.mrb[0].mxu0
      %480 = vmatprep.mubr.f32.mxu0 0.0
      %481 = vmatmul.mubr.f32.gmra.mrb[0].mxu0 %v279
      %v482 = vpop.f32.mrb[0].mxu0
      %v483 = vadd.f32 %v218, %v482
      %v484 = vpop.f32.mrb[0].mxu0
      %485 = vmatprep.mubr.f32.mxu0 0.0
      %486 = vmatmul.mubr.f32.gmra.mrb[0].mxu0 %v282
      %v487 = vpop.f32.mrb[0].mxu0
      %v488 = vadd.f32 %v218, %v487
      %v489 = vpop.f32.mrb[0].mxu0
      %490 = vmatprep.mubr.f32.mxu0 0.0
      %491 = vmatmul.mubr.f32.gmra.mrb[0].mxu0 %v285
      %v492 = vpop.f32.mrb[0].mxu0
      %v493 = vadd.f32 %v218, %v492
      %v494 = vpop.f32.mrb[0].mxu0
      %495 = vmatprep.mubr.f32.mxu0 0.0
      %496 = vmatmul.mubr.f32.gmra.mrb[0].mxu0 %v288
      %v497 = vpop.f32.mrb[0].mxu0
      %v498 = vadd.f32 %v218, %v497
      %v499 = vpop.f32.mrb[0].mxu0
      %500 = vmatprep.mubr.f32.mxu0 0.0
      %501 = vmatmul.mubr.f32.gmra.mrb[0].mxu0 %v291
      %v502 = vpop.f32.mrb[0].mxu0
      %v503 = vadd.f32 %v218, %v502
      %v504 = vpop.f32.mrb[0].mxu0
      %505 = vmatprep.mubr.f32.mxu0 0.0
      %506 = vmatmul.mubr.f32.gmra.mrb[0].mxu0 %v294
      %v507 = vpop.f32.mrb[0].mxu0
      %v508 = vadd.f32 %v218, %v507
      %v509 = vpop.f32.mrb[0].mxu0
      %510 = vmatprep.mubr.f32.mxu0 0.0
      %511 = vmatmul.mubr.f32.gmra.mrb[0].mxu0 %v297
      %v512 = vpop.f32.mrb[0].mxu0
      %v513 = vadd.f32 %v218, %v512
      %v514 = vpop.f32.mrb[0].mxu0
      %515 = vmatprep.mubr.f32.mxu0 0.0
      %516 = vmatmul.mubr.f32.gmra.mrb[0].mxu0 %v300
      %v517 = vpop.f32.mrb[0].mxu0
      %v518 = vadd.f32 %v218, %v517
      %v519 = vpop.f32.mrb[0].mxu0
      %520 = vmatprep.mubr.f32.mxu0 0.0
      %521 = vmatmul.mubr.f32.gmra.mrb[0].mxu0 %v303
      %v522 = vpop.f32.mrb[0].mxu0
      %v523 = vadd.f32 %v218, %v522
      %v524 = vpop.f32.mrb[0].mxu0
      %525 = vmatprep.mubr.f32.mxu0 0.0
      %526 = vmatmul.mubr.f32.gmra.mrb[0].mxu0 %v306
      %v527 = vpop.f32.mrb[0].mxu0
      %v528 = vadd.f32 %v218, %v527
      %v529 = vpop.f32.mrb[0].mxu0
      %530 = vmatprep.mubr.f32.mxu0 0.0
      %531 = vmatmul.mubr.f32.gmra.mrb[0].mxu0 %v309
      %v532 = vpop.f32.mrb[0].mxu0
      %v533 = vadd.f32 %v218, %v532
      %v534 = vpop.f32.mrb[0].mxu0
      %535 = vmatprep.mubr.f32.mxu0 0.0
      %536 = vmatmul.mubr.f32.gmra.mrb[0].mxu0 %v312
      %v537 = vpop.f32.mrb[0].mxu0
      %v538 = vadd.f32 %v218, %v537
      %v539 = vpop.f32.mrb[0].mxu0
      %540 = vmatprep.mubr.f32.mxu0 0.0
      %541 = vmatmul.mubr.f32.gmra.mrb[0].mxu0 %v315
      %v542 = vpop.f32.mrb[0].mxu0
      %v543 = vadd.f32 %v218, %v542
      %v544 = vpop.f32.mrb[0].mxu0
      %545 = vdwg.mxu0
      %v546 = vmax.f32 %v388, 0.0
      %v547 = vmax.f32 %v393, 0.0
      %v548 = vmax.f32 %v398, 0.0
      %v549 = vmax.f32 %v403, 0.0
      %v550 = vmax.f32 %v408, 0.0
      %v551 = vmax.f32 %v413, 0.0
      %v552 = vmax.f32 %v418, 0.0
      %v553 = vmax.f32 %v423, 0.0
      %v554 = vmax.f32 %v428, 0.0
      %v555 = vmax.f32 %v433, 0.0
      %v556 = vmax.f32 %v438, 0.0
      %v557 = vmax.f32 %v443, 0.0
      %v558 = vmax.f32 %v448, 0.0
      %v559 = vmax.f32 %v453, 0.0
      %v560 = vmax.f32 %v458, 0.0
      %v561 = vmax.f32 %v463, 0.0
      %v562 = vmax.f32 %v468, 0.0
      %v563 = vmax.f32 %v473, 0.0
      %v564 = vmax.f32 %v478, 0.0
      %v565 = vmax.f32 %v483, 0.0
      %v566 = vmax.f32 %v488, 0.0
      %v567 = vmax.f32 %v493, 0.0
      %v568 = vmax.f32 %v498, 0.0
      %v569 = vmax.f32 %v503, 0.0
      %v570 = vmax.f32 %v508, 0.0
      %v571 = vmax.f32 %v513, 0.0
      %v572 = vmax.f32 %v518, 0.0
      %v573 = vmax.f32 %v523, 0.0
      %v574 = vmax.f32 %v528, 0.0
      %v575 = vmax.f32 %v533, 0.0
      %v576 = vmax.f32 %v538, 0.0
      %v577 = vmax.f32 %v543, 0.0
      %578 = vst [vmem:[%s172] sm:$0xff] %v546
      %579 = vst [vmem:[%s172 + $0x8] sm:$0xff] %v547
      %580 = vst [vmem:[%s172 + $0x10] sm:$0xff] %v548
      %581 = vst [vmem:[%s172 + $0x18] sm:$0xff] %v549
      %582 = vst [vmem:[%s172 + $0x20] sm:$0xff] %v550
      %583 = vst [vmem:[%s172 + $0x28] sm:$0xff] %v551
      %584 = vst [vmem:[%s172 + $0x30] sm:$0xff] %v552
      %585 = vst [vmem:[%s172 + $0x38] sm:$0xff] %v553
      %586 = vst [vmem:[%s172 + $0x40] sm:$0xff] %v554
      %587 = vst [vmem:[%s172 + $0x48] sm:$0xff] %v555
      %588 = vst [vmem:[%s172 + $0x50] sm:$0xff] %v556
      %589 = vst [vmem:[%s172 + $0x58] sm:$0xff] %v557
      %590 = vst [vmem:[%s172 + $0x60] sm:$0xff] %v558
      %591 = vst [vmem:[%s172 + $0x68] sm:$0xff] %v559
      %592 = vst [vmem:[%s172 + $0x70] sm:$0xff] %v560
      %593 = vst [vmem:[%s172 + $0x78] sm:$0xff] %v561
      %594 = vst [vmem:[%s172 + $0x80] sm:$0xff] %v562
      %595 = vst [vmem:[%s172 + $0x88] sm:$0xff] %v563
      %596 = vst [vmem:[%s172 + $0x90] sm:$0xff] %v564
      %597 = vst [vmem:[%s172 + $0x98] sm:$0xff] %v565
      %598 = vst [vmem:[%s172 + $0xa0] sm:$0xff] %v566
      %599 = vst [vmem:[%s172 + $0xa8] sm:$0xff] %v567
      %600 = vst [vmem:[%s172 + $0xb0] sm:$0xff] %v568
      %601 = vst [vmem:[%s172 + $0xb8] sm:$0xff] %v569
      %602 = vst [vmem:[%s172 + $0xc0] sm:$0xff] %v570
      %603 = vst [vmem:[%s172 + $0xc8] sm:$0xff] %v571
      %604 = vst [vmem:[%s172 + $0xd0] sm:$0xff] %v572
      %605 = vst [vmem:[%s172 + $0xd8] sm:$0xff] %v573
      %606 = vst [vmem:[%s172 + $0xe0] sm:$0xff] %v574
      %607 = vst [vmem:[%s172 + $0xe8] sm:$0xff] %v575
      %608 = vst [vmem:[%s172 + $0xf0] sm:$0xff] %v576
      %609 = vst [vmem:[%s172 + $0xf8] sm:$0xff] %v577
      %s610 = smul.u32 32, %s14
      %p611 = scmp.lt.s32.totalorder %s610, 63
      %s612 = scalar_select %p611, %s610, 63
      %s613 = smul.addr %s612, 8
      %s614 = scalar_lea.vmem %s3, %s613
      // Predicated region
      $region33: #{_lambda_.1} parent=31 // pred_check
        %p615 = pneg %p100
      $region34: #{_lambda_.1} parent=31 // pred_check_branch
        %617 = sbr.rel (%p615) target = $region36
      $region35: #{_lambda_.1} parent=31 // pred_region
        %s618 = smul.u32 32, %s14
      $region36: #{_lambda_.1} parent=31 // pred_fallthru
        _
    $region32: #{_lambda_.1} parent=5 // pred_fallthru
      _
    %p619 = scmp.le.s32.totalorder 2, %s9
    // Predicated region
    $region37: #{_lambda_.1} parent=5 // pred_check
      %p620 = pneg %p619
    $region38: #{_lambda_.1} parent=5 // pred_check_branch
      %622 = sbr.rel (%p620) target = $region40
    $region39: #{_lambda_.1} parent=5 // pred_region
      %s623 = ssub.s32 %s9, 2
      // Predicated region
      $region41: #{_lambda_.1} parent=39 // pred_check
        %p624 = pneg %p106
      $region42: #{_lambda_.1} parent=39 // pred_check_branch
        %626 = sbr.rel (%p624) target = $region44
      $region43: #{_lambda_.1} parent=39 // pred_region
        %s627 = smul.u32 32, %s15
        %p628 = scmp.lt.s32.totalorder %s627, 63
        %s629 = scalar_select %p628, %s627, 63
        %s630 = smul.addr %s629, 8
        %s631 = scalar_lea.vmem %s3, %s630
      $region44: #{_lambda_.1} parent=39 // pred_fallthru
        _
    $region40: #{_lambda_.1} parent=5 // pred_fallthru
      _
  $region6: #{_lambda_.1} parent=0 // loop_footer
    %s13 = sadd.s32 1, %s9
  $region7: #{_lambda_.1} parent=0 // loop_footer_branch
    %8 = sbr.rel target = $region3
  $region8: #{_lambda_.1} parent=0 // loop_exit
    _

</llo_original>
